<compile_context>
chip_gen: v7x
topology: tpu7x:2x2x1
jax: 0.10.0
libtpu: 0.0.40
codegen_flags: <defaults>
</compile_context>

<pallas_src>
import functools

import jax
import jax.numpy as jnp
from jax.experimental import pallas as pl
from jax.experimental.pallas import tpu as pltpu

BN_EPS = 1e-5
LANE = 128
SUBLANE = 8


def _round_up(x, m):
    return (x + m - 1) // m * m


def _vmem_capacity_bytes():
    try:
        return int(pltpu.get_tpu_info().vmem_capacity_bytes)
    except Exception:
        return 64 << 20  # conservative default (v7x per-TC VMEM)


# ---------------------------------------------------------------------------
# Kernel
# ---------------------------------------------------------------------------
def classifier_kernel(x_ref, w1m_ref, w1a_ref, b1_ref, w2_ref, b2_ref, o_ref,
                      *, reduce_axis):
    # x_ref: (TB, C, HW) [NCHW, reduce_axis=2] or (TB, HW, C) [NHWC, reduce_axis=1]
    x = x_ref[...].astype(jnp.float32)   # f32 accumulation even for bf16 inputs

    # AdaptiveMaxPool2d(1) / AdaptiveAvgPool2d(1). 1/HW is folded into w1a, so
    # both branches are plain reductions over the same loaded vregs.
    mx = jnp.max(x, axis=reduce_axis)     # (TB, C)
    sm = jnp.sum(x, axis=reduce_axis)     # (TB, C)

    # concat([mx, av], 1) @ W1 == mx @ W1[:C] + av @ W1[C:]  (no concat / XLU copy)
    # Eval-mode BN is folded into W1/b1 in prepare_params.
    h = jnp.dot(mx, w1m_ref[...], preferred_element_type=jnp.float32)
    h = h + jnp.dot(sm, w1a_ref[...], preferred_element_type=jnp.float32)
    h = h + b1_ref[...]

    # ReLU (Dropout is identity in eval mode).
    h = jnp.maximum(h, 0.0)

    # Linear(100, out) — both dims lane-padded to 128, so the store is lane-dense.
    out = jnp.dot(h, w2_ref[...], preferred_element_type=jnp.float32) + b2_ref[...]
    o_ref[...] = out.astype(o_ref.dtype)


# ---------------------------------------------------------------------------
# Static weight preparation — call ONCE, reuse across forwards.
# ---------------------------------------------------------------------------
def prepare_params(params, hw):
    """Fold eval-mode BN and the avg-pool 1/HW into Linear1, split W1 into
    max/avg halves (concat-free matmuls), and zero-pad hidden/out to lane
    multiples. Weights are static in eval mode, so this runs outside the
    per-call path."""
    w1, b1, gamma, beta, rmean, rvar, w2, b2 = params
    in_channels, hidden = w1.shape
    out_channels = w2.shape[1]
    C = in_channels // 2

    scale = gamma * jax.lax.rsqrt(rvar + BN_EPS)        # (1, hidden)
    w1f = w1 * scale                                    # (2C, hidden)
    b1f = (b1 - rmean) * scale + beta                   # (1, hidden)

    hid_pad = _round_up(hidden, LANE)
    out_pad = _round_up(out_channels, LANE)

    w1m = jnp.zeros((C, hid_pad), jnp.float32).at[:, :hidden].set(w1f[:C])
    # fold 1/HW of the average pool so the kernel uses a plain sum
    w1a = jnp.zeros((C, hid_pad), jnp.float32).at[:, :hidden].set(w1f[C:] / hw)
    b1p = jnp.zeros((1, hid_pad), jnp.float32).at[:, :hidden].set(b1f)
    w2p = jnp.zeros((hid_pad, out_pad), jnp.float32).at[:hidden, :out_channels].set(w2)
    b2p = jnp.zeros((1, out_pad), jnp.float32).at[:, :out_channels].set(b2)
    return (w1m, w1a, b1p, w2p, b2p)


# ---------------------------------------------------------------------------
# Batch-tile selection (generation-aware)
# ---------------------------------------------------------------------------
def _pick_batch_tile(B, bytes_per_sample):
    vmem = _vmem_capacity_bytes()
    # x-tile target: bigger on 128 MiB parts (v5e/v6e), conservative on v7x
    # (64 MiB/TC, double-buffered).
    target = (16 << 20) if vmem >= (96 << 20) else (8 << 20)

    cap = max(SUBLANE, (target // max(1, bytes_per_sample)) // SUBLANE * SUBLANE)
    if cap >= 256:
        cap = cap // 128 * 128        # MXU-friendly when large
    cap = min(cap, 1024)

    if B <= SUBLANE:
        return B                       # tiny batch: single full tile
    if B <= cap:
        # >=2 grid steps so both v7x TensorCores get work (negligible cost on 1-TC chips)
        return _round_up(pl.cdiv(B, 2), SUBLANE)
    return cap


# ---------------------------------------------------------------------------
# Wrapper
# ---------------------------------------------------------------------------
def classifier_forward(x, prepared, out_channels, *, data_format="NCHW"):
    """x: (B, C, H, W) [NCHW] or (B, H, W, C) [NHWC]; f32 or bf16 (no upcast here —
    the dominant HBM read stays at the input's width). Returns (B, out_channels) f32."""
    w1m, w1a, b1p, w2p, b2p = prepared
    C = w1m.shape[0]
    hid_pad, out_pad = w2p.shape

    if data_format == "NCHW":
        B, Cx, H, W = x.shape
        HW = H * W
        x3 = x.reshape(B, C, HW)
        x_block = (None, C, HW)       # filled with TB below
        reduce_axis = 2
    elif data_format == "NHWC":
        B, H, W, Cx = x.shape
        HW = H * W
        x3 = x.reshape(B, HW, C)
        x_block = (None, HW, C)
        reduce_axis = 1
    else:
        raise ValueError(f"unknown data_format {data_format}")
    assert Cx == C, "channel count mismatch with prepared weights"

    itemsize = jnp.dtype(x3.dtype).itemsize
    per_sample = C * HW * itemsize
    TB = _pick_batch_tile(B, per_sample)
    grid = (pl.cdiv(B, TB),)          # no input padding: partial last block is fine
    x_block = (TB,) + x_block[1:]

    # VMEM budget: double-buffered x tile + output tile + resident params + margin.
    x_tile = TB * per_sample
    out_tile = TB * out_pad * 4
    param_bytes = (2 * C * hid_pad + hid_pad + hid_pad * out_pad + out_pad) * 4
    vmem_limit = int(2 * x_tile + 2 * out_tile + 2 * param_bytes + (4 << 20))
    vmem_limit = min(vmem_limit, int(0.9 * _vmem_capacity_bytes()))

    kernel = functools.partial(classifier_kernel, reduce_axis=reduce_axis)

    out = pl.pallas_call(
        kernel,
        out_shape=jax.ShapeDtypeStruct((B, out_pad), jnp.float32),
        grid_spec=pltpu.PrefetchScalarGridSpec(
            num_scalar_prefetch=0,
            grid=grid,
            in_specs=[
                pl.BlockSpec(x_block, lambda b: (b, 0, 0)),            # x tile
                pl.BlockSpec((C, hid_pad), lambda b: (0, 0)),          # W1 (max half, BN folded)
                pl.BlockSpec((C, hid_pad), lambda b: (0, 0)),          # W1 (avg half, BN+1/HW folded)
                pl.BlockSpec((1, hid_pad), lambda b: (0, 0)),          # b1 (BN folded)
                pl.BlockSpec((hid_pad, out_pad), lambda b: (0, 0)),    # W2
                pl.BlockSpec((1, out_pad), lambda b: (0, 0)),          # b2
            ],
            out_specs=pl.BlockSpec((TB, out_pad), lambda b: (b, 0)),
        ),
        compiler_params=pltpu.CompilerParams(
            dimension_semantics=("parallel",),
            vmem_limit_bytes=vmem_limit,
        ),
    )(x3, w1m, w1a, b1p, w2p, b2p)

    return out[:, :out_channels]


# ---------------------------------------------------------------------------
# Parameter init (PyTorch-shaped, stored transposed (in, out) for row-major matmul)
# ---------------------------------------------------------------------------
def init_params(key, in_channels, hidden, out_channels):
    k1, k2, k3, k4 = jax.random.split(key, 4)
    lim1 = 1.0 / jnp.sqrt(in_channels)
    w1 = jax.random.uniform(k1, (in_channels, hidden), jnp.float32, -lim1, lim1)
    b1 = jax.random.uniform(k2, (1, hidden), jnp.float32, -lim1, lim1)
    gamma = jnp.ones((1, hidden), jnp.float32)
    beta = jnp.zeros((1, hidden), jnp.float32)
    rmean = jnp.zeros((1, hidden), jnp.float32)
    rvar = jnp.ones((1, hidden), jnp.float32)
    lim2 = 1.0 / jnp.sqrt(hidden)
    w2 = jax.random.uniform(k3, (hidden, out_channels), jnp.float32, -lim2, lim2)
    b2 = jax.random.uniform(k4, (1, out_channels), jnp.float32, -lim2, lim2)
    return (w1, b1, gamma, beta, rmean, rvar, w2, b2)


def reference_forward(x, params):
    """Plain-JAX reference (eval-mode semantics)."""
    w1, b1, gamma, beta, rmean, rvar, w2, b2 = params
    B, C, H, W = x.shape
    x3 = x.reshape(B, C, H * W)
    feat = jnp.concatenate([jnp.max(x3, -1), jnp.mean(x3, -1)], axis=-1)
    h = feat @ w1 + b1
    h = (h - rmean) * jax.lax.rsqrt(rvar + BN_EPS) * gamma + beta
    h = jnp.maximum(h, 0.0)
    return h @ w2 + b2


if __name__ == "__main__":
    C, H, W = 16, 16, 16                # input feature map (NCHW)
    in_channels = 2 * C                 # AdaptiveConcatPool2d doubles channels
    hidden = 100
    out_channels = 10

    key = jax.random.PRNGKey(0)
    kx, kx2, kp = jax.random.split(key, 3)
    params = init_params(kp, in_channels, hidden, out_channels)

    # Fold/pad the (static, eval-mode) weights ONCE — outside the per-call path.
    prepared = prepare_params(params, H * W)

    # Small-batch check (single tile, NCHW).
    B = 2
    x = jax.random.normal(kx, (B, C, H, W), jnp.float32)
    out = jax.block_until_ready(classifier_forward(x, prepared, out_channels))
    ref = reference_forward(x, params)
    assert out.shape == (B, out_channels)
    assert jnp.allclose(out, ref, atol=1e-4, rtol=1e-4)

    # Larger batch: exercises >=2 grid steps and a partial (unpadded) last block.
    B2 = 20
    x2 = jax.random.normal(kx2, (B2, C, H, W), jnp.float32)
    out2 = jax.block_until_ready(classifier_forward(x2, prepared, out_channels))
    ref2 = reference_forward(x2, params)
    assert out2.shape == (B2, out_channels)
    assert jnp.allclose(out2, ref2, atol=1e-4, rtol=1e-4)

    # NHWC path (lane dim = C) — same numerics.
    x_nhwc = jnp.transpose(x, (0, 2, 3, 1))
    out3 = jax.block_until_ready(
        classifier_forward(x_nhwc, prepared, out_channels, data_format="NHWC"))
    assert jnp.allclose(out3, ref, atol=1e-4, rtol=1e-4)

    print("KERNEL_OK")
</pallas_src>

<mosaic_0001>
module attributes {stable_mosaic.version = 11 : i64} {
  func.func @classifier_kernel(%arg0: i32, %arg1: memref<2x16x256xf32, #tpu.memory_space<vmem>>, %arg2: memref<16x128xf32, #tpu.memory_space<vmem>>, %arg3: memref<16x128xf32, #tpu.memory_space<vmem>>, %arg4: memref<1x128xf32, #tpu.memory_space<vmem>>, %arg5: memref<128x128xf32, #tpu.memory_space<vmem>>, %arg6: memref<1x128xf32, #tpu.memory_space<vmem>>, %arg7: memref<2x128xf32, #tpu.memory_space<vmem>>) attributes {dimension_semantics = [#tpu.dimension_semantics<parallel>], iteration_bounds = array<i64: 1>, scalar_prefetch = 0 : i64, scratch_operands = 0 : i64, tpu.core_type = #tpu.core_type<tc>, window_params = [{transform_indices = @transform_0, window_bounds = array<i64: 2, 16, 256>}, {pipeline_mode = #tpu.pipeline_mode<synchronous>, transform_indices = @transform_1, window_bounds = array<i64: 16, 128>}, {pipeline_mode = #tpu.pipeline_mode<synchronous>, transform_indices = @transform_2, window_bounds = array<i64: 16, 128>}, {pipeline_mode = #tpu.pipeline_mode<synchronous>, transform_indices = @transform_3, window_bounds = array<i64: 1, 128>}, {pipeline_mode = #tpu.pipeline_mode<synchronous>, transform_indices = @transform_4, window_bounds = array<i64: 128, 128>}, {pipeline_mode = #tpu.pipeline_mode<synchronous>, transform_indices = @transform_5, window_bounds = array<i64: 1, 128>}, {transform_indices = @transform_6, window_bounds = array<i64: 2, 128>}]} {
    %c0 = arith.constant 0 : index
    %c0_0 = arith.constant 0 : index
    %c0_1 = arith.constant 0 : index
    %0 = vector.load %arg1[%c0, %c0_0, %c0_1] : memref<2x16x256xf32, #tpu.memory_space<vmem>>, vector<2x16x256xf32>
    %cst = arith.constant dense<0xFF800000> : vector<2x16xf32>
    %1 = vector.multi_reduction <maximumf>, %0, %cst [2] : vector<2x16x256xf32> to vector<2x16xf32>
    %cst_2 = arith.constant dense<0.000000e+00> : vector<2x16xf32>
    %2 = vector.multi_reduction <add>, %0, %cst_2 [2] : vector<2x16x256xf32> to vector<2x16xf32>
    %c0_3 = arith.constant 0 : index
    %c0_4 = arith.constant 0 : index
    %3 = vector.load %arg2[%c0_3, %c0_4] : memref<16x128xf32, #tpu.memory_space<vmem>>, vector<16x128xf32>
    %cst_5 = arith.constant dense<0.000000e+00> : vector<2x128xf32>
    %4 = tpu.matmul %1, %3, %cst_5 {dimension_numbers = #tpu.dot_dimension_numbers<[1], [0], [0], [1], [0, 0, 1, 1], [], []>} : vector<2x16xf32>, vector<16x128xf32>, vector<2x128xf32> -> vector<2x128xf32>
    %c0_6 = arith.constant 0 : index
    %c0_7 = arith.constant 0 : index
    %5 = vector.load %arg3[%c0_6, %c0_7] : memref<16x128xf32, #tpu.memory_space<vmem>>, vector<16x128xf32>
    %cst_8 = arith.constant dense<0.000000e+00> : vector<2x128xf32>
    %6 = tpu.matmul %2, %5, %cst_8 {dimension_numbers = #tpu.dot_dimension_numbers<[1], [0], [0], [1], [0, 0, 1, 1], [], []>} : vector<2x16xf32>, vector<16x128xf32>, vector<2x128xf32> -> vector<2x128xf32>
    %7 = arith.addf %4, %6 : vector<2x128xf32>
    %c0_9 = arith.constant 0 : index
    %c0_10 = arith.constant 0 : index
    %8 = vector.load %arg4[%c0_9, %c0_10] : memref<1x128xf32, #tpu.memory_space<vmem>>, vector<1x128xf32>
    %9 = vector.broadcast %8 : vector<1x128xf32> to vector<2x128xf32>
    %10 = arith.addf %7, %9 : vector<2x128xf32>
    %cst_11 = arith.constant 0.000000e+00 : f32
    %11 = vector.broadcast %cst_11 : f32 to vector<2x128xf32>
    %12 = arith.maximumf %10, %11 : vector<2x128xf32>
    %c0_12 = arith.constant 0 : index
    %c0_13 = arith.constant 0 : index
    %13 = vector.load %arg5[%c0_12, %c0_13] : memref<128x128xf32, #tpu.memory_space<vmem>>, vector<128x128xf32>
    %cst_14 = arith.constant dense<0.000000e+00> : vector<2x128xf32>
    %14 = tpu.matmul %12, %13, %cst_14 {dimension_numbers = #tpu.dot_dimension_numbers<[1], [0], [0], [1], [0, 0, 1, 1], [], []>} : vector<2x128xf32>, vector<128x128xf32>, vector<2x128xf32> -> vector<2x128xf32>
    %c0_15 = arith.constant 0 : index
    %c0_16 = arith.constant 0 : index
    %15 = vector.load %arg6[%c0_15, %c0_16] : memref<1x128xf32, #tpu.memory_space<vmem>>, vector<1x128xf32>
    %16 = vector.broadcast %15 : vector<1x128xf32> to vector<2x128xf32>
    %17 = arith.addf %14, %16 : vector<2x128xf32>
    %c0_17 = arith.constant 0 : index
    %c0_18 = arith.constant 0 : index
    %18 = vector.load %arg7[%c0_17, %c0_18] : memref<2x128xf32, #tpu.memory_space<vmem>>, vector<2x128xf32>
    tpu.vector_store %arg7[%c0_17, %c0_18], %17 {strides = array<i32>} : memref<2x128xf32, #tpu.memory_space<vmem>>, vector<2x128xf32>,
    return
  }
  func.func @transform_0(%arg0: i32) -> (i32, i32, i32) {
    %c0_i32 = arith.constant 0 : i32
    %c0_i32_0 = arith.constant 0 : i32
    %c0_i32_1 = arith.constant 0 : i32
    return %arg0, %c0_i32, %c0_i32_0 : i32, i32, i32
  }
  func.func @transform_1(%arg0: i32) -> (i32, i32) {
    %c0_i32 = arith.constant 0 : i32
    %c0_i32_0 = arith.constant 0 : i32
    %c0_i32_1 = arith.constant 0 : i32
    return %c0_i32, %c0_i32_0 : i32, i32
  }
  func.func @transform_2(%arg0: i32) -> (i32, i32) {
    %c0_i32 = arith.constant 0 : i32
    %c0_i32_0 = arith.constant 0 : i32
    %c0_i32_1 = arith.constant 0 : i32
    return %c0_i32, %c0_i32_0 : i32, i32
  }
  func.func @transform_3(%arg0: i32) -> (i32, i32) {
    %c0_i32 = arith.constant 0 : i32
    %c0_i32_0 = arith.constant 0 : i32
    %c0_i32_1 = arith.constant 0 : i32
    return %c0_i32, %c0_i32_0 : i32, i32
  }
  func.func @transform_4(%arg0: i32) -> (i32, i32) {
    %c0_i32 = arith.constant 0 : i32
    %c0_i32_0 = arith.constant 0 : i32
    %c0_i32_1 = arith.constant 0 : i32
    return %c0_i32, %c0_i32_0 : i32, i32
  }
  func.func @transform_5(%arg0: i32) -> (i32, i32) {
    %c0_i32 = arith.constant 0 : i32
    %c0_i32_0 = arith.constant 0 : i32
    %c0_i32_1 = arith.constant 0 : i32
    return %c0_i32, %c0_i32_0 : i32, i32
  }
  func.func @transform_6(%arg0: i32) -> (i32, i32) {
    %c0_i32 = arith.constant 0 : i32
    %c0_i32_0 = arith.constant 0 : i32
    return %arg0, %c0_i32 : i32, i32
  }
}

</mosaic_0001>

<llo_original>
// kernel: tpu_custom_call.1
$region0: #{tpu_custom_call.1}
  #allocation0 [shape = 'u32[]', space=smem, size = 0x4, offset = 0x4, fixed_abs, tag = 'smem constant byte address 0x4 - core index']
  #allocation1 [shape = 'u32[144,128]{1,0:T(1,128)}', space=vmem, size = 0x12000, scoped, tag = 'internal scratch']
  %s0 = inlined_call_operand.hbm [shape: f32[2,16,256], index: 0, kind: input, shape index: {}]
  %s1 = inlined_call_operand.hbm [shape: f32[16,128], index: 1, kind: input, shape index: {}]
  %s2 = inlined_call_operand.hbm [shape: f32[16,128], index: 2, kind: input, shape index: {}]
  %s3 = inlined_call_operand.vmem [shape: f32[1,128], index: 3, kind: input, shape index: {}]
  %s4 = inlined_call_operand.hbm [shape: f32[128,128], index: 4, kind: input, shape index: {}]
  %s5 = inlined_call_operand.vmem [shape: f32[1,128], index: 5, kind: input, shape index: {}]
  %s6 = inlined_call_operand.hbm [shape: f32[2,128], index: 6, kind: output, shape index: {}]
  %s7 = sld [smem:[#allocation0]]
  $region50: #{tpu_custom_call.1} parent=0
    _
  %s9 = ssub.s32 1, %s7
  %s10 = scalar_select 0, %s9, %s7
  $region1: #{tpu_custom_call.1} parent=0
    #allocation2 [shape = 'u8[32768]{0}', space=vmem, size = 0x8000, scoped, tag = 'input window, operand 0, single buffered']
    #allocation3 [shape = 's32[1]{0}', space=sflag, size = 0x4, scoped, tag = 'scoped memory for tpu_custom_call.1']
    #allocation4 [shape = 's32[1]{0}', space=sflag, size = 0x4, scoped, tag = 'scoped memory for tpu_custom_call.1']
    #allocation5 [shape = 'u8[8192]{0}', space=vmem, size = 0x2000, scoped, tag = 'input window, operand 1, single buffered']
    #allocation6 [shape = 's32[1]{0}', space=sflag, size = 0x4, scoped, tag = 'scoped memory for tpu_custom_call.1']
    #allocation7 [shape = 'u8[8192]{0}', space=vmem, size = 0x2000, scoped, tag = 'input window, operand 2, single buffered']
    #allocation8 [shape = 'u8[65536]{0}', space=vmem, size = 0x10000, scoped, tag = 'input window, operand 4, single buffered']
    #allocation9 [shape = 's32[1]{0}', space=sflag, size = 0x4, scoped, tag = 'scoped memory for tpu_custom_call.1']
    #allocation10 [shape = 'u8[1024]{0}', space=vmem, size = 0x400, scoped, tag = 'output window, operand 0, single buffered']
    %11 = vsyncpa [#allocation3], 0
    %12 = vsyncpa [#allocation6], 0
    %13 = vsyncpa [#allocation9], 0
    %14 = vsyncpa [#allocation4], 0
    // Predicated region
    $region2: #{tpu_custom_call.1} parent=1 // pred_check
      _
    $region3: #{tpu_custom_call.1} parent=1 // pred_check_branch
      %16 = sbr.rel (0) target = $region5
    $region4: #{tpu_custom_call.1} parent=1 // pred_region
      %s18 = ssub.s32 1024, 1024
      %19 = vsyncadd [#allocation3], %s18
      %s20 = sshll.u32 [#allocation2], 4
      %s21 = int_to_ptr.vmem [resolvable:$true] %s20
      %26 = dma.hbm_to_vmem [thread:$0]  %s0, 1024, %s21, [#allocation3], 256, 256, 16
    $region5: #{tpu_custom_call.1} parent=1 // pred_fallthru
      _
    // Predicated region
    $region6: #{tpu_custom_call.1} parent=1 // pred_check
      _
    $region7: #{tpu_custom_call.1} parent=1 // pred_check_branch
      %28 = sbr.rel (0) target = $region9
    $region8: #{tpu_custom_call.1} parent=1 // pred_region
      %s30 = ssub.s32 256, 256
      %31 = vsyncadd [#allocation6], %s30
      %s32 = sshll.u32 [#allocation5], 4
      %s33 = int_to_ptr.vmem [resolvable:$true] %s32
      %38 = dma.hbm_to_vmem [thread:$0]  %s1, 256, %s33, [#allocation6], 128, 128, 8
    $region9: #{tpu_custom_call.1} parent=1 // pred_fallthru
      _
    // Predicated region
    $region10: #{tpu_custom_call.1} parent=1 // pred_check
      _
    $region11: #{tpu_custom_call.1} parent=1 // pred_check_branch
      %40 = sbr.rel (0) target = $region13
    $region12: #{tpu_custom_call.1} parent=1 // pred_region
      %s42 = ssub.s32 256, 256
      %43 = vsyncadd [#allocation6], %s42
      %s44 = sshll.u32 [#allocation7], 4
      %s45 = int_to_ptr.vmem [resolvable:$true] %s44
      %50 = dma.hbm_to_vmem [thread:$0]  %s2, 256, %s45, [#allocation6], 128, 128, 8
    $region13: #{tpu_custom_call.1} parent=1 // pred_fallthru
      _
    // Predicated region
    $region14: #{tpu_custom_call.1} parent=1 // pred_check
      _
    $region15: #{tpu_custom_call.1} parent=1 // pred_check_branch
      %52 = sbr.rel (0) target = $region17
    $region16: #{tpu_custom_call.1} parent=1 // pred_region
      _
    $region17: #{tpu_custom_call.1} parent=1 // pred_fallthru
      _
    // Predicated region
    $region18: #{tpu_custom_call.1} parent=1 // pred_check
      _
    $region19: #{tpu_custom_call.1} parent=1 // pred_check_branch
      %54 = sbr.rel (0) target = $region21
    $region20: #{tpu_custom_call.1} parent=1 // pred_region
      %s56 = ssub.s32 2048, 2048
      %57 = vsyncadd [#allocation9], %s56
      %s58 = sshll.u32 [#allocation8], 4
      %s59 = int_to_ptr.vmem [resolvable:$true] %s58
      %64 = dma.hbm_to_vmem [thread:$0]  %s4, 2048, %s59, [#allocation9], 128, 128, 8
    $region21: #{tpu_custom_call.1} parent=1 // pred_fallthru
      _
    // Predicated region
    $region22: #{tpu_custom_call.1} parent=1 // pred_check
      _
    $region23: #{tpu_custom_call.1} parent=1 // pred_check_branch
      %66 = sbr.rel (0) target = $region25
    $region24: #{tpu_custom_call.1} parent=1 // pred_region
      _
    $region25: #{tpu_custom_call.1} parent=1 // pred_fallthru
      _
    // Predicated region
    $region26: #{tpu_custom_call.1} parent=1 // pred_check
      _
    $region27: #{tpu_custom_call.1} parent=1 // pred_check_branch
      %68 = sbr.rel (0) target = $region29
    $region28: #{tpu_custom_call.1} parent=1 // pred_region
      %69 = dma.done [#allocation3], 1024
    $region29: #{tpu_custom_call.1} parent=1 // pred_fallthru
      _
    // Predicated region
    $region30: #{tpu_custom_call.1} parent=1 // pred_check
      _
    $region31: #{tpu_custom_call.1} parent=1 // pred_check_branch
      %71 = sbr.rel (0) target = $region33
    $region32: #{tpu_custom_call.1} parent=1 // pred_region
      %72 = dma.done [#allocation6], 256
    $region33: #{tpu_custom_call.1} parent=1 // pred_fallthru
      _
    // Predicated region
    $region34: #{tpu_custom_call.1} parent=1 // pred_check
      _
    $region35: #{tpu_custom_call.1} parent=1 // pred_check_branch
      %74 = sbr.rel (0) target = $region37
    $region36: #{tpu_custom_call.1} parent=1 // pred_region
      %75 = dma.done [#allocation6], 256
    $region37: #{tpu_custom_call.1} parent=1 // pred_fallthru
      _
    // Predicated region
    $region38: #{tpu_custom_call.1} parent=1 // pred_check
      _
    $region39: #{tpu_custom_call.1} parent=1 // pred_check_branch
      %77 = sbr.rel (0) target = $region41
    $region40: #{tpu_custom_call.1} parent=1 // pred_region
      %78 = dma.done [#allocation9], 2048
    $region41: #{tpu_custom_call.1} parent=1 // pred_fallthru
      _
    %v79 = vld [vmem:[#allocation2] sm:$0xff]
    %v80 = vld [vmem:[#allocation2 + $0x8] sm:$0xff]
    %v81 = vld [vmem:[#allocation2 + $0x10] sm:$0xff]
    %v82 = vld [vmem:[#allocation2 + $0x18] sm:$0xff]
    %v83 = vld [vmem:[#allocation2 + $0x20] sm:$0xff]
    %v84 = vld [vmem:[#allocation2 + $0x28] sm:$0xff]
    %v85 = vld [vmem:[#allocation2 + $0x30] sm:$0xff]
    %v86 = vld [vmem:[#allocation2 + $0x38] sm:$0xff]
    %v87 = vmax.f32 %v79, %v80
    %88 = vmax.xlane.f32.xlu0 %v87
    %v89 = vpop.xlane.xlu0 %88
    %v90 = vmax.f32 %v81, %v82
    %91 = vmax.xlane.f32.xlu0 %v90
    %v92 = vpop.xlane.xlu0 %91
    %v93 = vmax.f32 %v83, %v84
    %94 = vmax.xlane.f32.xlu0 %v93
    %v95 = vpop.xlane.xlu0 %94
    %v96 = vmax.f32 %v85, %v86
    %97 = vmax.xlane.f32.xlu0 %v96
    %v98 = vpop.xlane.xlu0 %97
    %v99 = vadd.f32 %v79, %v80
    %100 = vadd.xlane.f32.xlu0 %v99
    %v101 = vpop.xlane.xlu0 %100
    %v102 = vadd.f32 %v81, %v82
    %103 = vadd.xlane.f32.xlu0 %v102
    %v104 = vpop.xlane.xlu0 %103
    %v105 = vadd.f32 %v83, %v84
    %106 = vadd.xlane.f32.xlu0 %v105
    %v107 = vpop.xlane.xlu0 %106
    %v108 = vadd.f32 %v85, %v86
    %109 = vadd.xlane.f32.xlu0 %v108
    %v110 = vpop.xlane.xlu0 %109
    %v111 = vld [vmem:[#allocation5] sm:$0xff]
    %v112 = vld [vmem:[#allocation5 + $0x8] sm:$0xff]
    %v113 = vld [vmem:[#allocation7] sm:$0xff]
    %v114 = vld [vmem:[#allocation7 + $0x8] sm:$0xff]
    %v119 = vlaneseq
    %v120 = vand.u32 %v119, 127
    %v121 = vlaneseq
    %v122 = vshrl.u32 %v121, 7
    %v123 = vsub.s32 %v120, %v122
    %v124 = vrot.slane %v101, %v123
    %v125 = vadd.s32 %v120, 4294967288
    %v126 = vlaneseq
    %v127 = vshrl.u32 %v126, 7
    %v128 = vsub.s32 %v125, %v127
    %v129 = vrot.slane %v104, %v128
    %vm130 = vcmask 130112
    %v131 = vsel %vm130, %v129, %v124
    %v132 = vlaneseq
    %v133 = vshrl.u32 %v132, 7
    %v134 = vsub.s32 %v120, %v133
    %v135 = vrot.slane %v107, %v134
    %v136 = vlaneseq
    %v137 = vshrl.u32 %v136, 7
    %v138 = vsub.s32 %v125, %v137
    %v139 = vrot.slane %v110, %v138
    %v140 = vsel %vm130, %v139, %v135
    %vm141 = vcmask 1041409
    %v142 = vsel %vm141, %v140, %v131
    %vm143 = vcmask 130048
    %v144 = vsel %vm143, %v142, 0
    %146 = vmatprep.subr.mxu0 0.0
    %147 = vmatpush1.msra.mxu0 %v113
    %148 = vmatprep.subr.mxu0 0.0
    %149 = vmatpush1.msra.mxu0 %v114
    %150 = vmatprep.subr.mxu0 0.0
    %151 = vmatpush1.msra.mxu0 0.0
    %152 = vmatprep.subr.mxu0 0.0
    %153 = vmatpush1.msra.mxu0 0.0
    %154 = vmatprep.subr.mxu0 0.0
    %155 = vmatpush1.msra.mxu0 0.0
    %156 = vmatprep.subr.mxu0 0.0
    %157 = vmatpush1.msra.mxu0 0.0
    %158 = vmatprep.subr.mxu0 0.0
    %159 = vmatpush1.msra.mxu0 0.0
    %160 = vmatprep.subr.mxu0 0.0
    %161 = vmatpush1.msra.mxu0 0.0
    %162 = vmatprep.subr.mxu0 0.0
    %163 = vmatpush1.msra.mxu0 0.0
    %164 = vmatprep.subr.mxu0 0.0
    %165 = vmatpush1.msra.mxu0 0.0
    %166 = vmatprep.subr.mxu0 0.0
    %167 = vmatpush1.msra.mxu0 0.0
    %168 = vmatprep.subr.mxu0 0.0
    %169 = vmatpush1.msra.mxu0 0.0
    %170 = vmatprep.subr.mxu0 0.0
    %171 = vmatpush1.msra.mxu0 0.0
    %172 = vmatprep.subr.mxu0 0.0
    %173 = vmatpush1.msra.mxu0 0.0
    %174 = vmatprep.subr.mxu0 0.0
    %175 = vmatpush1.msra.mxu0 0.0
    %176 = vmatprep.subr.mxu0 0.0
    %177 = vmatpush1.msra.mxu0 0.0
    %178 = vmatprep.subr.mxu0 0.0
    %179 = vmatpush1.msra.mxu0 0.0
    %180 = vmatprep.subr.mxu0 0.0
    %181 = vmatpush1.msra.mxu0 0.0
    %182 = vmatprep.subr.mxu0 0.0
    %183 = vmatpush1.msra.mxu0 0.0
    %184 = vmatprep.subr.mxu0 0.0
    %185 = vmatpush1.msra.mxu0 0.0
    %186 = vmatprep.subr.mxu0 0.0
    %187 = vmatpush1.msra.mxu0 0.0
    %188 = vmatprep.subr.mxu0 0.0
    %189 = vmatpush1.msra.mxu0 0.0
    %190 = vmatprep.subr.mxu0 0.0
    %191 = vmatpush1.msra.mxu0 0.0
    %192 = vmatprep.subr.mxu0 0.0
    %193 = vmatpush1.msra.mxu0 0.0
    %194 = vmatprep.subr.mxu0 0.0
    %195 = vmatpush1.msra.mxu0 0.0
    %196 = vmatprep.subr.mxu0 0.0
    %197 = vmatpush1.msra.mxu0 0.0
    %198 = vmatprep.subr.mxu0 0.0
    %199 = vmatpush1.msra.mxu0 0.0
    %200 = vmatprep.subr.mxu0 0.0
    %201 = vmatpush1.msra.mxu0 0.0
    %202 = vmatprep.subr.mxu0 0.0
    %203 = vmatpush1.msra.mxu0 0.0
    %204 = vmatprep.subr.mxu0 0.0
    %205 = vmatpush1.msra.mxu0 0.0
    %206 = vmatprep.subr.mxu0 0.0
    %207 = vmatpush1.msra.mxu0 0.0
    %208 = vmatprep.subr.mxu0 0.0
    %209 = vmatpush1.msra.mxu0 0.0
    %210 = vmatprep.mubr.f32.mxu0 0.0
    %211 = vmatmul.mubr.f32.gmra.mrb[0].mxu0 %v144
    %v212 = vpop.f32.mrb[0].mxu0
    %v213 = vadd.f32 0.0, %v212
    %v214 = vpop.f32.mrb[0].mxu0
    %215 = vdwg.mxu0
    %v220 = vlaneseq
    %v221 = vshrl.u32 %v220, 7
    %v222 = vsub.s32 %v120, %v221
    %v223 = vrot.slane %v89, %v222
    %v224 = vlaneseq
    %v225 = vshrl.u32 %v224, 7
    %v226 = vsub.s32 %v125, %v225
    %v227 = vrot.slane %v92, %v226
    %v228 = vsel %vm130, %v227, %v223
    %v229 = vlaneseq
    %v230 = vshrl.u32 %v229, 7
    %v231 = vsub.s32 %v120, %v230
    %v232 = vrot.slane %v95, %v231
    %v233 = vlaneseq
    %v234 = vshrl.u32 %v233, 7
    %v235 = vsub.s32 %v125, %v234
    %v236 = vrot.slane %v98, %v235
    %v237 = vsel %vm130, %v236, %v232
    %v238 = vsel %vm141, %v237, %v228
    %v239 = vsel %vm143, %v238, 0
    %241 = vmatprep.subr.mxu0 0.0
    %242 = vmatpush1.msra.mxu0 %v111
    %243 = vmatprep.subr.mxu0 0.0
    %244 = vmatpush1.msra.mxu0 %v112
    %245 = vmatprep.subr.mxu0 0.0
    %246 = vmatpush1.msra.mxu0 0.0
    %247 = vmatprep.subr.mxu0 0.0
    %248 = vmatpush1.msra.mxu0 0.0
    %249 = vmatprep.subr.mxu0 0.0
    %250 = vmatpush1.msra.mxu0 0.0
    %251 = vmatprep.subr.mxu0 0.0
    %252 = vmatpush1.msra.mxu0 0.0
    %253 = vmatprep.subr.mxu0 0.0
    %254 = vmatpush1.msra.mxu0 0.0
    %255 = vmatprep.subr.mxu0 0.0
    %256 = vmatpush1.msra.mxu0 0.0
    %257 = vmatprep.subr.mxu0 0.0
    %258 = vmatpush1.msra.mxu0 0.0
    %259 = vmatprep.subr.mxu0 0.0
    %260 = vmatpush1.msra.mxu0 0.0
    %261 = vmatprep.subr.mxu0 0.0
    %262 = vmatpush1.msra.mxu0 0.0
    %263 = vmatprep.subr.mxu0 0.0
    %264 = vmatpush1.msra.mxu0 0.0
    %265 = vmatprep.subr.mxu0 0.0
    %266 = vmatpush1.msra.mxu0 0.0
    %267 = vmatprep.subr.mxu0 0.0
    %268 = vmatpush1.msra.mxu0 0.0
    %269 = vmatprep.subr.mxu0 0.0
    %270 = vmatpush1.msra.mxu0 0.0
    %271 = vmatprep.subr.mxu0 0.0
    %272 = vmatpush1.msra.mxu0 0.0
    %273 = vmatprep.subr.mxu0 0.0
    %274 = vmatpush1.msra.mxu0 0.0
    %275 = vmatprep.subr.mxu0 0.0
    %276 = vmatpush1.msra.mxu0 0.0
    %277 = vmatprep.subr.mxu0 0.0
    %278 = vmatpush1.msra.mxu0 0.0
    %279 = vmatprep.subr.mxu0 0.0
    %280 = vmatpush1.msra.mxu0 0.0
    %281 = vmatprep.subr.mxu0 0.0
    %282 = vmatpush1.msra.mxu0 0.0
    %283 = vmatprep.subr.mxu0 0.0
    %284 = vmatpush1.msra.mxu0 0.0
    %285 = vmatprep.subr.mxu0 0.0
    %286 = vmatpush1.msra.mxu0 0.0
    %287 = vmatprep.subr.mxu0 0.0
    %288 = vmatpush1.msra.mxu0 0.0
    %289 = vmatprep.subr.mxu0 0.0
    %290 = vmatpush1.msra.mxu0 0.0
    %291 = vmatprep.subr.mxu0 0.0
    %292 = vmatpush1.msra.mxu0 0.0
    %293 = vmatprep.subr.mxu0 0.0
    %294 = vmatpush1.msra.mxu0 0.0
    %295 = vmatprep.subr.mxu0 0.0
    %296 = vmatpush1.msra.mxu0 0.0
    %297 = vmatprep.subr.mxu0 0.0
    %298 = vmatpush1.msra.mxu0 0.0
    %299 = vmatprep.subr.mxu0 0.0
    %300 = vmatpush1.msra.mxu0 0.0
    %301 = vmatprep.subr.mxu0 0.0
    %302 = vmatpush1.msra.mxu0 0.0
    %303 = vmatprep.subr.mxu0 0.0
    %304 = vmatpush1.msra.mxu0 0.0
    %305 = vmatprep.mubr.f32.mxu0 0.0
    %306 = vmatmul.mubr.f32.gmra.mrb[0].mxu0 %v239
    %v307 = vpop.f32.mrb[0].mxu0
    %v308 = vadd.f32 %v213, %v307
    %v309 = vpop.f32.mrb[0].mxu0
    %310 = vdwg.mxu0
    %v311 = vld [vmem:[%s3] sm:$0x1]
    %v313 = vlaneseq
    %v314 = vshrl.u32 %v313, 7
    %v315 = vsub.s32 0, %v314
    %v316 = vrot.slane %v311, %v315
    %v318 = vadd.f32 %v308, %v316
    %v319 = vmax.f32 %v318, 0.0
    %v320 = vld [vmem:[#allocation8] sm:$0xff]
    %v321 = vld [vmem:[#allocation8 + $0x8] sm:$0xff]
    %v322 = vld [vmem:[#allocation8 + $0x10] sm:$0xff]
    %v323 = vld [vmem:[#allocation8 + $0x18] sm:$0xff]
    %v324 = vld [vmem:[#allocation8 + $0x20] sm:$0xff]
    %v325 = vld [vmem:[#allocation8 + $0x28] sm:$0xff]
    %v326 = vld [vmem:[#allocation8 + $0x30] sm:$0xff]
    %v327 = vld [vmem:[#allocation8 + $0x38] sm:$0xff]
    %v328 = vld [vmem:[#allocation8 + $0x40] sm:$0xff]
    %v329 = vld [vmem:[#allocation8 + $0x48] sm:$0xff]
    %v330 = vld [vmem:[#allocation8 + $0x50] sm:$0xff]
    %v331 = vld [vmem:[#allocation8 + $0x58] sm:$0xff]
    %v332 = vld [vmem:[#allocation8 + $0x60] sm:$0xff]
    %v333 = vld [vmem:[#allocation8 + $0x68] sm:$0xff]
    %v334 = vld [vmem:[#allocation8 + $0x70] sm:$0xff]
    %v335 = vld [vmem:[#allocation8 + $0x78] sm:$0xff]
    %v336 = vld [vmem:[%s5] sm:$0x1]
    %v338 = vlaneseq
    %v339 = vshrl.u32 %v338, 7
    %v340 = vsub.s32 0, %v339
    %v341 = vrot.slane %v336, %v340
    %343 = vmatprep.subr.mxu0 0.0
    %344 = vmatpush1.msra.mxu0 %v320
    %345 = vmatprep.subr.mxu0 0.0
    %346 = vmatpush1.msra.mxu0 %v321
    %347 = vmatprep.subr.mxu0 0.0
    %348 = vmatpush1.msra.mxu0 %v322
    %349 = vmatprep.subr.mxu0 0.0
    %350 = vmatpush1.msra.mxu0 %v323
    %351 = vmatprep.subr.mxu0 0.0
    %352 = vmatpush1.msra.mxu0 %v324
    %353 = vmatprep.subr.mxu0 0.0
    %354 = vmatpush1.msra.mxu0 %v325
    %355 = vmatprep.subr.mxu0 0.0
    %356 = vmatpush1.msra.mxu0 %v326
    %357 = vmatprep.subr.mxu0 0.0
    %358 = vmatpush1.msra.mxu0 %v327
    %359 = vmatprep.subr.mxu0 0.0
    %360 = vmatpush1.msra.mxu0 %v328
    %361 = vmatprep.subr.mxu0 0.0
    %362 = vmatpush1.msra.mxu0 %v329
    %363 = vmatprep.subr.mxu0 0.0
    %364 = vmatpush1.msra.mxu0 %v330
    %365 = vmatprep.subr.mxu0 0.0
    %366 = vmatpush1.msra.mxu0 %v331
    %367 = vmatprep.subr.mxu0 0.0
    %368 = vmatpush1.msra.mxu0 %v332
    %369 = vmatprep.subr.mxu0 0.0
    %370 = vmatpush1.msra.mxu0 %v333
    %371 = vmatprep.subr.mxu0 0.0
    %372 = vmatpush1.msra.mxu0 %v334
    %373 = vmatprep.subr.mxu0 0.0
    %374 = vmatpush1.msra.mxu0 %v335
    %375 = vmatprep.subr.mxu0 0.0
    %376 = vmatpush1.msra.mxu0 0.0
    %377 = vmatprep.subr.mxu0 0.0
    %378 = vmatpush1.msra.mxu0 0.0
    %379 = vmatprep.subr.mxu0 0.0
    %380 = vmatpush1.msra.mxu0 0.0
    %381 = vmatprep.subr.mxu0 0.0
    %382 = vmatpush1.msra.mxu0 0.0
    %383 = vmatprep.subr.mxu0 0.0
    %384 = vmatpush1.msra.mxu0 0.0
    %385 = vmatprep.subr.mxu0 0.0
    %386 = vmatpush1.msra.mxu0 0.0
    %387 = vmatprep.subr.mxu0 0.0
    %388 = vmatpush1.msra.mxu0 0.0
    %389 = vmatprep.subr.mxu0 0.0
    %390 = vmatpush1.msra.mxu0 0.0
    %391 = vmatprep.subr.mxu0 0.0
    %392 = vmatpush1.msra.mxu0 0.0
    %393 = vmatprep.subr.mxu0 0.0
    %394 = vmatpush1.msra.mxu0 0.0
    %395 = vmatprep.subr.mxu0 0.0
    %396 = vmatpush1.msra.mxu0 0.0
    %397 = vmatprep.subr.mxu0 0.0
    %398 = vmatpush1.msra.mxu0 0.0
    %399 = vmatprep.subr.mxu0 0.0
    %400 = vmatpush1.msra.mxu0 0.0
    %401 = vmatprep.subr.mxu0 0.0
    %402 = vmatpush1.msra.mxu0 0.0
    %403 = vmatprep.subr.mxu0 0.0
    %404 = vmatpush1.msra.mxu0 0.0
    %405 = vmatprep.subr.mxu0 0.0
    %406 = vmatpush1.msra.mxu0 0.0
    %407 = vmatprep.mubr.f32.mxu0 0.0
    %408 = vmatmul.mubr.f32.gmra.mrb[0].mxu0 %v319
    %v409 = vpop.f32.mrb[0].mxu0
    %v410 = vadd.f32 %v341, %v409
    %v411 = vpop.f32.mrb[0].mxu0
    %412 = vdwg.mxu0
    %413 = vst [vmem:[#allocation10] sm:$0x3] %v410
    // Predicated region
    $region42: #{tpu_custom_call.1} parent=1 // pred_check
      _
    $region43: #{tpu_custom_call.1} parent=1 // pred_check_branch
      %415 = sbr.rel (0) target = $region45
    $region44: #{tpu_custom_call.1} parent=1 // pred_region
      %s417 = ssub.s32 32, 32
      %418 = vsyncadd [#allocation4], %s417
      %s420 = sshll.u32 [#allocation10], 4
      %s421 = int_to_ptr.vmem [resolvable:$true] %s420
      %423 = dma.vmem_to_hbm [thread:$0]  %s421, 32, %s6, [#allocation4]
    $region45: #{tpu_custom_call.1} parent=1 // pred_fallthru
      _
    // Predicated region
    $region46: #{tpu_custom_call.1} parent=1 // pred_check
      _
    $region47: #{tpu_custom_call.1} parent=1 // pred_check_branch
      %425 = sbr.rel (0) target = $region49
    $region48: #{tpu_custom_call.1} parent=1 // pred_region
      %426 = dma.done [#allocation4], 32
    $region49: #{tpu_custom_call.1} parent=1 // pred_fallthru
      _
    %427 = vsyncpa [#allocation3], 1
    %428 = vsyncpa [#allocation6], 1
    %429 = vsyncpa [#allocation9], 1
    %430 = vsyncpa [#allocation4], 1

</llo_original>
